<compile_context>
chip_gen: v7x
topology: tpu7x:2x2x1
jax: 0.10.0
libtpu: 0.0.40
codegen_flags: <defaults>
</compile_context>

<pallas_src>
import functools

import jax
import jax.numpy as jnp
from jax.experimental import pallas as pl
from jax.experimental.pallas import tpu as pltpu

NUM_CLASSES = 11  # Config.num_classes


def _round_up(x, m):
    return (x + m - 1) // m * m


# ---------------------------------------------------------------------------
# Fused kernel: conv-as-matmul + BN shift + ReLU + global-avg-pool + FC.
#
# Grid = (N, num_m_tiles).  Per grid step:
#   patches_ref : (1, TM, Kpad)  bf16   im2col rows of image n, tile mi
#   w_ref       : (Kpad, Cpad)   bf16   conv weights with BN scale folded in
#   shift_ref   : (1, Cpad)      f32    folded BN shift
#   fc_w_ref    : (Cpad, Npad)   f32    FC weights (zero-padded)
#   fc_b_ref    : (1, Npad)      f32    FC bias (zero-padded)
#   o_ref       : (1, 1, Npad)   f32    logits for image n (written at last mi)
#   acc_ref     : (1, Cpad)      f32    VMEM scratch: running column sums
# ---------------------------------------------------------------------------
def fused_stem_head_kernel(patches_ref, w_ref, shift_ref, fc_w_ref, fc_b_ref,
                           o_ref, acc_ref, *, tm, m_valid, m_padded, inv_hw):
    mi = pl.program_id(1)

    @pl.when(mi == 0)
    def _():
        acc_ref[...] = jnp.zeros_like(acc_ref)

    # conv tile on the MXU (bf16 inputs, f32 accumulation), fused BN + ReLU.
    conv = jnp.dot(patches_ref[0], w_ref[...],
                   preferred_element_type=jnp.float32)          # [TM, Cpad]
    y = jnp.maximum(conv + shift_ref[...], 0.0)

    if m_padded != m_valid:
        # Zero out rows that are pure M-padding (relu(shift) would otherwise
        # pollute the pooled mean).  Static branch: only traced when needed.
        rows = mi * tm + jax.lax.broadcasted_iota(jnp.int32, (tm, 1), 0)
        y = jnp.where(rows < m_valid, y, 0.0)

    # Accumulate column sums for the global average pool.
    acc_ref[...] += jnp.sum(y, axis=0, keepdims=True)           # [1, Cpad]

    @pl.when(mi == pl.num_programs(1) - 1)
    def _():
        pooled = acc_ref[...] * inv_hw                          # [1, Cpad]
        logits = jnp.dot(pooled, fc_w_ref[...],
                         preferred_element_type=jnp.float32) + fc_b_ref[...]
        o_ref[...] = logits.reshape(o_ref.shape).astype(o_ref.dtype)


# ---------------------------------------------------------------------------
# im2col in NHWC feature order (kh, kw, cin): no 5-D transpose of the
# expanded tensor; the conv weight is reordered to match instead.
# ---------------------------------------------------------------------------
def extract_patches_nhwc(x_nchw, kh, kw, stride, pad):
    n, cin, h, w = x_nchw.shape
    x = jnp.transpose(x_nchw, (0, 2, 3, 1))                     # [N, H, W, Cin]
    ho = (h + 2 * pad - kh) // stride + 1
    wo = (w + 2 * pad - kw) // stride + 1
    xp = jnp.pad(x, ((0, 0), (pad, pad), (pad, pad), (0, 0)))
    cols = []
    for dy in range(kh):
        for dx in range(kw):
            cols.append(xp[:, dy:dy + ho * stride:stride,
                           dx:dx + wo * stride:stride, :])      # [N, Ho, Wo, Cin]
    patches = jnp.concatenate(cols, axis=-1)                    # feat order (kh, kw, cin)
    return patches.reshape(n, ho * wo, kh * kw * cin), ho, wo


@functools.partial(jax.jit, static_argnames=("kh", "kw", "stride", "pad", "tm"))
def custom_model_forward(x, params, *, kh=7, kw=7, stride=2, pad=3, tm=512):
    """x: [N, Cin, H, W] float32 (NCHW, PyTorch convention)."""
    n, cin, _, _ = x.shape
    conv_w = params["conv_w"]                                   # [Cout, Cin, kh, kw]
    cout = conv_w.shape[0]
    fc_w = params["fc_w"]                                       # [Cout, ncls]
    ncls = fc_w.shape[1]

    patches, ho, wo = extract_patches_nhwc(x, kh, kw, stride, pad)   # [N, M, K]
    m = ho * wo
    k = cin * kh * kw

    # Lane/sublane alignment: pad K and Cout / num_classes to 128 multiples,
    # pad M per image to a multiple of the row tile.
    kpad = _round_up(k, 128)
    cpad = _round_up(cout, 128)
    npad = _round_up(ncls, 128)
    tm_eff = _round_up(min(tm, _round_up(m, 8)), 8)
    m_pad = _round_up(m, tm_eff)
    num_m = m_pad // tm_eff

    patches = jnp.pad(patches,
                      ((0, 0), (0, m_pad - m), (0, kpad - k))).astype(jnp.bfloat16)

    # Fold BN scale into the conv weights; keep the shift as an in-kernel add.
    eps = 1e-5
    scale = params["bn_gamma"] / jnp.sqrt(params["bn_var"] + eps)     # [Cout]
    shift = params["bn_beta"] - params["bn_mean"] * scale             # [Cout]
    w_mat = conv_w.transpose(2, 3, 1, 0).reshape(k, cout)             # (kh,kw,cin) x Cout
    w_mat = w_mat * scale[None, :]
    w_mat = jnp.pad(w_mat, ((0, kpad - k), (0, cpad - cout))).astype(jnp.bfloat16)
    shift_p = jnp.pad(shift, (0, cpad - cout)).reshape(1, cpad).astype(jnp.float32)

    fc_w_p = jnp.pad(fc_w, ((0, cpad - cout), (0, npad - ncls))).astype(jnp.float32)
    fc_b_p = jnp.pad(params["fc_b"], (0, npad - ncls)).reshape(1, npad).astype(jnp.float32)

    kernel = functools.partial(fused_stem_head_kernel,
                               tm=tm_eff, m_valid=m, m_padded=m_pad,
                               inv_hw=1.0 / float(m))

    out = pl.pallas_call(
        kernel,
        out_shape=jax.ShapeDtypeStruct((n, 1, npad), jnp.float32),
        grid_spec=pltpu.PrefetchScalarGridSpec(
            num_scalar_prefetch=0,
            grid=(n, num_m),
            in_specs=[
                pl.BlockSpec((1, tm_eff, kpad), lambda ni, mi: (ni, mi, 0)),
                pl.BlockSpec((kpad, cpad), lambda ni, mi: (0, 0)),
                pl.BlockSpec((1, cpad), lambda ni, mi: (0, 0)),
                pl.BlockSpec((cpad, npad), lambda ni, mi: (0, 0)),
                pl.BlockSpec((1, npad), lambda ni, mi: (0, 0)),
            ],
            out_specs=pl.BlockSpec((1, 1, npad), lambda ni, mi: (ni, 0, 0)),
            scratch_shapes=[pltpu.VMEM((1, cpad), jnp.float32)],
        ),
        compiler_params=pltpu.CompilerParams(
            # batch axis parallel (v7x megacore), M axis is a pooled reduction.
            dimension_semantics=("parallel", "arbitrary"),
            vmem_limit_bytes=48 * 1024 * 1024,   # explicit, under v7x 64 MiB physical
        ),
    )(patches, w_mat, shift_p, fc_w_p, fc_b_p)

    return out.reshape(n, npad)[:, :ncls]                        # [N, NUM_CLASSES]


# ---------------------------------------------------------------------------
# Pure-JAX reference (f32) for a correctness sanity check.
# ---------------------------------------------------------------------------
def reference_forward(x, params, *, kh=7, kw=7, stride=2, pad=3):
    conv = jax.lax.conv_general_dilated(
        x, params["conv_w"], window_strides=(stride, stride),
        padding=[(pad, pad), (pad, pad)],
        dimension_numbers=("NCHW", "OIHW", "NCHW"))
    eps = 1e-5
    scale = params["bn_gamma"] / jnp.sqrt(params["bn_var"] + eps)
    shift = params["bn_beta"] - params["bn_mean"] * scale
    y = jnp.maximum(conv * scale[None, :, None, None] + shift[None, :, None, None], 0.0)
    pooled = jnp.mean(y, axis=(2, 3))                            # [N, Cout]
    return pooled @ params["fc_w"] + params["fc_b"]


def init_params(key, cin=3, cout=32, kh=7, kw=7, num_classes=NUM_CLASSES):
    k1, k2, k3 = jax.random.split(key, 3)
    return {
        "conv_w": jax.random.normal(k1, (cout, cin, kh, kw), jnp.float32) * 0.05,
        "bn_gamma": jnp.ones((cout,), jnp.float32),
        "bn_beta": jnp.zeros((cout,), jnp.float32),
        "bn_mean": jnp.zeros((cout,), jnp.float32),
        "bn_var": jnp.ones((cout,), jnp.float32),
        "fc_w": jax.random.normal(k2, (cout, num_classes), jnp.float32) * 0.05,
        "fc_b": jax.random.normal(k3, (num_classes,), jnp.float32) * 0.01,
    }


if __name__ == "__main__":
    key = jax.random.PRNGKey(0)
    kx, kp = jax.random.split(key)

    # Small NCHW batch consistent with the model's forward (RGB image batch).
    x = jax.random.normal(kx, (2, 3, 16, 16), jnp.float32)
    params = init_params(kp)

    # tm=32 so the toy 16x16 input (Ho*Wo = 64) exercises the multi-step
    # M-reduction / pooled-accumulator path (2 tiles per image).
    out = custom_model_forward(x, params, tm=32)
    out = jax.block_until_ready(out)

    assert out.shape == (2, NUM_CLASSES), out.shape
    assert bool(jnp.all(jnp.isfinite(out)))

    ref = jax.block_until_ready(reference_forward(x, params))
    assert bool(jnp.allclose(out, ref, atol=3e-2, rtol=3e-2)), (out, ref)

    print("KERNEL_OK")
</pallas_src>

<mosaic_0001>
module attributes {stable_mosaic.version = 11 : i64} {
  func.func @fused_stem_head_kernel(%arg0: i32, %arg1: i32, %arg2: memref<1x32x256xbf16, #tpu.memory_space<vmem>>, %arg3: memref<256x128xbf16, #tpu.memory_space<vmem>>, %arg4: memref<1x128xf32, #tpu.memory_space<vmem>>, %arg5: memref<128x128xf32, #tpu.memory_space<vmem>>, %arg6: memref<1x128xf32, #tpu.memory_space<vmem>>, %arg7: memref<1x1x128xf32, #tpu.memory_space<vmem>>, %arg8: memref<1x128xf32, #tpu.memory_space<vmem>>) attributes {dimension_semantics = [#tpu.dimension_semantics<parallel>, #tpu.dimension_semantics<arbitrary>], iteration_bounds = array<i64: 2, 2>, scalar_prefetch = 0 : i64, scratch_operands = 1 : i64, tpu.core_type = #tpu.core_type<tc>, window_params = [{transform_indices = @transform_0, window_bounds = array<i64: 1, 32, 256>}, {pipeline_mode = #tpu.pipeline_mode<synchronous>, transform_indices = @transform_1, window_bounds = array<i64: 256, 128>}, {pipeline_mode = #tpu.pipeline_mode<synchronous>, transform_indices = @transform_2, window_bounds = array<i64: 1, 128>}, {pipeline_mode = #tpu.pipeline_mode<synchronous>, transform_indices = @transform_3, window_bounds = array<i64: 128, 128>}, {pipeline_mode = #tpu.pipeline_mode<synchronous>, transform_indices = @transform_4, window_bounds = array<i64: 1, 128>}, {transform_indices = @transform_5, window_bounds = array<i64: 1, 1, 128>}]} {
    %c0_i32 = arith.constant 0 : i32
    %0 = arith.cmpi eq, %arg1, %c0_i32 : i32
    %1 = arith.extui %0 : i1 to i32
    %c0_i32_0 = arith.constant 0 : i32
    %2 = arith.cmpi ne, %1, %c0_i32_0 : i32
    scf.if %2 {
      %cst_14 = arith.constant 0.000000e+00 : f32
      %20 = vector.broadcast %cst_14 : f32 to vector<1x128xf32>
      %c0_15 = arith.constant 0 : index
      %c0_16 = arith.constant 0 : index
      %21 = vector.load %arg8[%c0_15, %c0_16] : memref<1x128xf32, #tpu.memory_space<vmem>>, vector<1x128xf32>
      tpu.vector_store %arg8[%c0_15, %c0_16], %20 {strides = array<i32>} : memref<1x128xf32, #tpu.memory_space<vmem>>, vector<1x128xf32>,
    } else {
    }
    %c0 = arith.constant 0 : index
    %c0_1 = arith.constant 0 : index
    %c0_2 = arith.constant 0 : index
    %3 = vector.load %arg2[%c0, %c0_1, %c0_2] : memref<1x32x256xbf16, #tpu.memory_space<vmem>>, vector<1x32x256xbf16>
    %4 = vector.shape_cast %3 : vector<1x32x256xbf16> to vector<32x256xbf16>
    %c0_3 = arith.constant 0 : index
    %c0_4 = arith.constant 0 : index
    %5 = vector.load %arg3[%c0_3, %c0_4] : memref<256x128xbf16, #tpu.memory_space<vmem>>, vector<256x128xbf16>
    %cst = arith.constant dense<0.000000e+00> : vector<32x128xf32>
    %6 = tpu.matmul %4, %5, %cst {dimension_numbers = #tpu.dot_dimension_numbers<[1], [0], [0], [1], [0, 0, 1, 1], [], []>} : vector<32x256xbf16>, vector<256x128xbf16>, vector<32x128xf32> -> vector<32x128xf32>
    %c0_5 = arith.constant 0 : index
    %c0_6 = arith.constant 0 : index
    %7 = vector.load %arg4[%c0_5, %c0_6] : memref<1x128xf32, #tpu.memory_space<vmem>>, vector<1x128xf32>
    %8 = vector.broadcast %7 : vector<1x128xf32> to vector<32x128xf32>
    %9 = arith.addf %6, %8 : vector<32x128xf32>
    %cst_7 = arith.constant 0.000000e+00 : f32
    %10 = vector.broadcast %cst_7 : f32 to vector<32x128xf32>
    %11 = arith.maximumf %9, %10 : vector<32x128xf32>
    %c0_8 = arith.constant 0 : index
    %c0_9 = arith.constant 0 : index
    %12 = vector.load %arg8[%c0_8, %c0_9] : memref<1x128xf32, #tpu.memory_space<vmem>>, vector<1x128xf32>
    %cst_10 = arith.constant dense<0.000000e+00> : vector<128xf32>
    %13 = vector.multi_reduction <add>, %11, %cst_10 [0] : vector<32x128xf32> to vector<128xf32>
    %14 = vector.shape_cast %13 : vector<128xf32> to vector<1x128xf32>
    %15 = arith.addf %12, %14 : vector<1x128xf32>
    %c0_11 = arith.constant 0 : index
    %c0_12 = arith.constant 0 : index
    %16 = vector.load %arg8[%c0_11, %c0_12] : memref<1x128xf32, #tpu.memory_space<vmem>>, vector<1x128xf32>
    tpu.vector_store %arg8[%c0_11, %c0_12], %15 {strides = array<i32>} : memref<1x128xf32, #tpu.memory_space<vmem>>, vector<1x128xf32>,
    %c1_i32 = arith.constant 1 : i32
    %17 = arith.cmpi eq, %arg1, %c1_i32 : i32
    %18 = arith.extui %17 : i1 to i32
    %c0_i32_13 = arith.constant 0 : i32
    %19 = arith.cmpi ne, %18, %c0_i32_13 : i32
    scf.if %19 {
      %c0_14 = arith.constant 0 : index
      %c0_15 = arith.constant 0 : index
      %20 = vector.load %arg8[%c0_14, %c0_15] : memref<1x128xf32, #tpu.memory_space<vmem>>, vector<1x128xf32>
      %cst_16 = arith.constant 1.562500e-02 : f32
      %21 = vector.broadcast %cst_16 : f32 to vector<1x128xf32>
      %22 = arith.mulf %20, %21 : vector<1x128xf32>
      %c0_17 = arith.constant 0 : index
      %c0_18 = arith.constant 0 : index
      %23 = vector.load %arg5[%c0_17, %c0_18] : memref<128x128xf32, #tpu.memory_space<vmem>>, vector<128x128xf32>
      %cst_19 = arith.constant dense<0.000000e+00> : vector<1x128xf32>
      %24 = tpu.matmul %22, %23, %cst_19 {dimension_numbers = #tpu.dot_dimension_numbers<[1], [0], [0], [1], [0, 0, 1, 1], [], []>} : vector<1x128xf32>, vector<128x128xf32>, vector<1x128xf32> -> vector<1x128xf32>
      %c0_20 = arith.constant 0 : index
      %c0_21 = arith.constant 0 : index
      %25 = vector.load %arg6[%c0_20, %c0_21] : memref<1x128xf32, #tpu.memory_space<vmem>>, vector<1x128xf32>
      %26 = arith.addf %24, %25 : vector<1x128xf32>
      %27 = vector.shape_cast %26 : vector<1x128xf32> to vector<1x1x128xf32>
      %c0_22 = arith.constant 0 : index
      %c0_23 = arith.constant 0 : index
      %c0_24 = arith.constant 0 : index
      %28 = vector.load %arg7[%c0_22, %c0_23, %c0_24] : memref<1x1x128xf32, #tpu.memory_space<vmem>>, vector<1x1x128xf32>
      tpu.vector_store %arg7[%c0_22, %c0_23, %c0_24], %27 {strides = array<i32>} : memref<1x1x128xf32, #tpu.memory_space<vmem>>, vector<1x1x128xf32>,
    } else {
    }
    return
  }
  func.func @transform_0(%arg0: i32, %arg1: i32) -> (i32, i32, i32) {
    %c0_i32 = arith.constant 0 : i32
    %c0_i32_0 = arith.constant 0 : i32
    return %arg0, %arg1, %c0_i32 : i32, i32, i32
  }
  func.func @transform_1(%arg0: i32, %arg1: i32) -> (i32, i32) {
    %c0_i32 = arith.constant 0 : i32
    %c0_i32_0 = arith.constant 0 : i32
    %c0_i32_1 = arith.constant 0 : i32
    return %c0_i32, %c0_i32_0 : i32, i32
  }
  func.func @transform_2(%arg0: i32, %arg1: i32) -> (i32, i32) {
    %c0_i32 = arith.constant 0 : i32
    %c0_i32_0 = arith.constant 0 : i32
    %c0_i32_1 = arith.constant 0 : i32
    return %c0_i32, %c0_i32_0 : i32, i32
  }
  func.func @transform_3(%arg0: i32, %arg1: i32) -> (i32, i32) {
    %c0_i32 = arith.constant 0 : i32
    %c0_i32_0 = arith.constant 0 : i32
    %c0_i32_1 = arith.constant 0 : i32
    return %c0_i32, %c0_i32_0 : i32, i32
  }
  func.func @transform_4(%arg0: i32, %arg1: i32) -> (i32, i32) {
    %c0_i32 = arith.constant 0 : i32
    %c0_i32_0 = arith.constant 0 : i32
    %c0_i32_1 = arith.constant 0 : i32
    return %c0_i32, %c0_i32_0 : i32, i32
  }
  func.func @transform_5(%arg0: i32, %arg1: i32) -> (i32, i32, i32) {
    %c0_i32 = arith.constant 0 : i32
    %c0_i32_0 = arith.constant 0 : i32
    %c0_i32_1 = arith.constant 0 : i32
    return %arg0, %c0_i32, %c0_i32_0 : i32, i32, i32
  }
}

</mosaic_0001>

<llo_original>
// kernel: custom_model_forward.1
$region0: #{custom_model_forward.1}
  #allocation0 [shape = 'u32[]', space=smem, size = 0x4, offset = 0x4, fixed_abs, tag = 'smem constant byte address 0x4 - core index']
  #allocation1 [shape = 'u32[144,128]{1,0:T(1,128)}', space=vmem, size = 0x12000, scoped, tag = 'internal scratch']
  #allocation2 [shape = 'f32[1,128]{1,0:T(1,128)}', space=vmem, size = 0x200, scoped, tag = 'scratch operand']
  %s0 = inlined_call_operand.vmem [shape: bf16[2,64,256], index: 0, kind: input, shape index: {}]
  %s1 = inlined_call_operand.vmem [shape: bf16[256,128], index: 1, kind: input, shape index: {}]
  %s2 = inlined_call_operand.vmem [shape: f32[1,128], index: 2, kind: input, shape index: {}]
  %s3 = inlined_call_operand.vmem [shape: f32[128,128], index: 3, kind: input, shape index: {}]
  %s4 = inlined_call_operand.vmem [shape: f32[1,128], index: 4, kind: input, shape index: {}]
  %s5 = inlined_call_operand.hbm [shape: f32[2,1,128], index: 5, kind: output, shape index: {}]
  %s6 = sld [smem:[#allocation0]]
  $region61: #{custom_model_forward.1} parent=0
    _
  %s8 = ssub.s32 1, %s6
  %s9 = scalar_select 0, %s8, %s6
  $region1: #{custom_model_forward.1} parent=0
    #allocation3 [shape = 'u8[1024]{0}', space=vmem, size = 0x400, scoped, tag = 'output window, operand 0']
    #allocation4 [shape = 's32[2]{0}', space=sflag, size = 0x8, scoped, tag = 'scoped memory for custom_model_forward.1']
    %10 = vsyncpa [#allocation4], 0
    %s11 = scalar_lea.sflag [#allocation4], 1
    %12 = vsyncpa %s11, 0
    loop: start=0, step=1, limit=6
    $region2: #{custom_model_forward.1} parent=1 // loop_pre_header
      _
    $region3: #{custom_model_forward.1} parent=1 // loop_header
      %s14 = sphi 0, %s18
      %p15 = scmp.ge.s32.totalorder %s14, 6
      %s21 = sphi 0, %s33
      %s22 = sphi 0, %s29
      %s23 = sphi 0, %s21
      %s24 = sphi 0, %s22
      %s25 = sphi 0, %s23
      %s26 = sphi 0, %s24
      %s38 = sphi 0, %s40
      %s41 = sphi 0, %s38
      %s42 = sphi 0, %s41
      %s58 = sphi 0, %s42
      %s62 = sphi 0, %s62
      %s64 = sphi 0, %s62
      %s65 = sphi 0, %s64
      %s79 = sphi 0, %s65
      %s83 = sphi 0, %s83
      %s85 = sphi 0, %s83
      %s86 = sphi 0, %s85
      %s100 = sphi 0, %s86
      %s104 = sphi 0, %s104
      %s106 = sphi 0, %s104
      %s107 = sphi 0, %s106
      %s121 = sphi 0, %s107
      %s125 = sphi 0, %s125
      %s127 = sphi 0, %s125
      %s128 = sphi 0, %s127
      %s142 = sphi 0, %s128
      %s148 = sphi 0, %s150
      %s151 = sphi 0, %s148
      %s152 = sphi 0, %s151
      %s168 = sphi 0, %s152
    $region4: #{custom_model_forward.1} parent=1 // loop_header_branch
      %17 = sbr.rel (%p15) target = $region8
    $region5: #{custom_model_forward.1} parent=1 // loop_body
      %s19 = ssub.s32 %s14, 1
      %s20 = ssub.s32 %s14, 2
      %s27 = sadd.s32 1, %s22
      %p28 = scmp.ge.s32.totalorder %s27, 2
      %s29 = scalar_select %p28, 0, %s27
      %s30 = sadd.s32 1, %s21
      %s31 = scalar_select %p28, %s30, %s21
      %p32 = scmp.ge.s32.totalorder %s31, 2
      %s33 = scalar_select %p32, 0, %s31
      %s34 = ssub.s32 %s21, %s33
      %s35 = ssub.s32 %s22, %s29
      %s36 = sor.u32 %s34, %s35
      %p37 = scmp.eq.s32.totalorder %s36, 0
      %s39 = sadd.s32 %s38, 1
      %s40 = scalar_select %p37, %s38, %s39
      %p43 = pneg %p37
      %p44 = scmp.eq.s32.totalorder %s14, 3
      %p45 = por %p43, %p44
      %p46 = scmp.ne.s32.totalorder %s38, %s41
      %p47 = scmp.eq.s32.totalorder %s14, 0
      %p48 = por %p46, %p47
      %p49 = scmp.ne.s32.totalorder %s38, %s41
      %p50 = scmp.eq.s32.totalorder %s19, 3
      %p51 = por %p49, %p50
      %p52 = scmp.ne.s32.totalorder %s41, %s42
      %p53 = scmp.eq.s32.totalorder %s19, 0
      %p54 = por %p52, %p53
      %p55 = scmp.ne.s32.totalorder %s41, %s42
      %p56 = scmp.eq.s32.totalorder %s20, 3
      %p57 = por %p55, %p56
      %p59 = scmp.ne.s32.totalorder %s42, %s58
      %p60 = scmp.eq.s32.totalorder %s20, 0
      %p61 = por %p59, %p60
      %s63 = sadd.s32 %s62, 1
      %p66 = scmp.eq.s32.totalorder %s14, 3
      %p67 = scmp.ne.s32.totalorder %s62, %s64
      %p68 = scmp.eq.s32.totalorder %s14, 0
      %p69 = por %p67, %p68
      %p70 = scmp.ne.s32.totalorder %s62, %s64
      %p71 = scmp.eq.s32.totalorder %s19, 3
      %p72 = por %p70, %p71
      %p73 = scmp.ne.s32.totalorder %s64, %s65
      %p74 = scmp.eq.s32.totalorder %s19, 0
      %p75 = por %p73, %p74
      %p76 = scmp.ne.s32.totalorder %s64, %s65
      %p77 = scmp.eq.s32.totalorder %s20, 3
      %p78 = por %p76, %p77
      %p80 = scmp.ne.s32.totalorder %s65, %s79
      %p81 = scmp.eq.s32.totalorder %s20, 0
      %p82 = por %p80, %p81
      %s84 = sadd.s32 %s83, 1
      %p87 = scmp.eq.s32.totalorder %s14, 3
      %p88 = scmp.ne.s32.totalorder %s83, %s85
      %p89 = scmp.eq.s32.totalorder %s14, 0
      %p90 = por %p88, %p89
      %p91 = scmp.ne.s32.totalorder %s83, %s85
      %p92 = scmp.eq.s32.totalorder %s19, 3
      %p93 = por %p91, %p92
      %p94 = scmp.ne.s32.totalorder %s85, %s86
      %p95 = scmp.eq.s32.totalorder %s19, 0
      %p96 = por %p94, %p95
      %p97 = scmp.ne.s32.totalorder %s85, %s86
      %p98 = scmp.eq.s32.totalorder %s20, 3
      %p99 = por %p97, %p98
      %p101 = scmp.ne.s32.totalorder %s86, %s100
      %p102 = scmp.eq.s32.totalorder %s20, 0
      %p103 = por %p101, %p102
      %s105 = sadd.s32 %s104, 1
      %p108 = scmp.eq.s32.totalorder %s14, 3
      %p109 = scmp.ne.s32.totalorder %s104, %s106
      %p110 = scmp.eq.s32.totalorder %s14, 0
      %p111 = por %p109, %p110
      %p112 = scmp.ne.s32.totalorder %s104, %s106
      %p113 = scmp.eq.s32.totalorder %s19, 3
      %p114 = por %p112, %p113
      %p115 = scmp.ne.s32.totalorder %s106, %s107
      %p116 = scmp.eq.s32.totalorder %s19, 0
      %p117 = por %p115, %p116
      %p118 = scmp.ne.s32.totalorder %s106, %s107
      %p119 = scmp.eq.s32.totalorder %s20, 3
      %p120 = por %p118, %p119
      %p122 = scmp.ne.s32.totalorder %s107, %s121
      %p123 = scmp.eq.s32.totalorder %s20, 0
      %p124 = por %p122, %p123
      %s126 = sadd.s32 %s125, 1
      %p129 = scmp.eq.s32.totalorder %s14, 3
      %p130 = scmp.ne.s32.totalorder %s125, %s127
      %p131 = scmp.eq.s32.totalorder %s14, 0
      %p132 = por %p130, %p131
      %p133 = scmp.ne.s32.totalorder %s125, %s127
      %p134 = scmp.eq.s32.totalorder %s19, 3
      %p135 = por %p133, %p134
      %p136 = scmp.ne.s32.totalorder %s127, %s128
      %p137 = scmp.eq.s32.totalorder %s19, 0
      %p138 = por %p136, %p137
      %p139 = scmp.ne.s32.totalorder %s127, %s128
      %p140 = scmp.eq.s32.totalorder %s20, 3
      %p141 = por %p139, %p140
      %p143 = scmp.ne.s32.totalorder %s128, %s142
      %p144 = scmp.eq.s32.totalorder %s20, 0
      %p145 = por %p143, %p144
      %s146 = ssub.s32 %s21, %s33
      %p147 = scmp.eq.s32.totalorder %s146, 0
      %s149 = sadd.s32 %s148, 1
      %s150 = scalar_select %p147, %s148, %s149
      %p153 = pneg %p147
      %p154 = scmp.eq.s32.totalorder %s14, 3
      %p155 = por %p153, %p154
      %p156 = scmp.ne.s32.totalorder %s148, %s151
      %p157 = scmp.eq.s32.totalorder %s14, 0
      %p158 = por %p156, %p157
      %p159 = scmp.ne.s32.totalorder %s148, %s151
      %p160 = scmp.eq.s32.totalorder %s19, 3
      %p161 = por %p159, %p160
      %p162 = scmp.ne.s32.totalorder %s151, %s152
      %p163 = scmp.eq.s32.totalorder %s19, 0
      %p164 = por %p162, %p163
      %p165 = scmp.ne.s32.totalorder %s151, %s152
      %p166 = scmp.eq.s32.totalorder %s20, 3
      %p167 = por %p165, %p166
      %p169 = scmp.ne.s32.totalorder %s152, %s168
      %p170 = scmp.eq.s32.totalorder %s20, 0
      %p171 = por %p169, %p170
      %p172 = scmp.le.s32.totalorder 1, %s14
      %p173 = scmp.lt.s32.totalorder %s14, 5
      %p174 = pnand %p172, %p173
      %p175 = pneg %p174
      // Predicated region
      $region9: #{custom_model_forward.1} parent=5 // pred_check
        _
      $region10: #{custom_model_forward.1} parent=5 // pred_check_branch
        %177 = sbr.rel (%p174) target = $region12
      $region11: #{custom_model_forward.1} parent=5 // pred_region
        %s178 = ssub.s32 %s14, 1
        // Predicated region
        $region13: #{custom_model_forward.1} parent=11 // pred_check
          %p179 = pneg %p75
        $region14: #{custom_model_forward.1} parent=11 // pred_check_branch
          %181 = sbr.rel (%p179) target = $region16
        $region15: #{custom_model_forward.1} parent=11 // pred_region
          _
        $region16: #{custom_model_forward.1} parent=11 // pred_fallthru
          _
        // Predicated region
        $region17: #{custom_model_forward.1} parent=11 // pred_check
          %p182 = pneg %p96
        $region18: #{custom_model_forward.1} parent=11 // pred_check_branch
          %184 = sbr.rel (%p182) target = $region20
        $region19: #{custom_model_forward.1} parent=11 // pred_region
          _
        $region20: #{custom_model_forward.1} parent=11 // pred_fallthru
          _
        // Predicated region
        $region21: #{custom_model_forward.1} parent=11 // pred_check
          %p185 = pneg %p117
        $region22: #{custom_model_forward.1} parent=11 // pred_check_branch
          %187 = sbr.rel (%p185) target = $region24
        $region23: #{custom_model_forward.1} parent=11 // pred_region
          _
        $region24: #{custom_model_forward.1} parent=11 // pred_fallthru
          _
        // Predicated region
        $region25: #{custom_model_forward.1} parent=11 // pred_check
          %p188 = pneg %p138
        $region26: #{custom_model_forward.1} parent=11 // pred_check_branch
          %190 = sbr.rel (%p188) target = $region28
        $region27: #{custom_model_forward.1} parent=11 // pred_region
          _
        $region28: #{custom_model_forward.1} parent=11 // pred_fallthru
          _
      $region12: #{custom_model_forward.1} parent=5 // pred_fallthru
        _
      %p191 = scmp.lt.s32.totalorder %s14, 4
      // Predicated region
      $region29: #{custom_model_forward.1} parent=5 // pred_check
        %p192 = pneg %p191
      $region30: #{custom_model_forward.1} parent=5 // pred_check_branch
        %194 = sbr.rel (%p192) target = $region32
      $region31: #{custom_model_forward.1} parent=5 // pred_region
        // Predicated region
        $region33: #{custom_model_forward.1} parent=31 // pred_check
          %p195 = pneg %p48
        $region34: #{custom_model_forward.1} parent=31 // pred_check_branch
          %197 = sbr.rel (%p195) target = $region36
        $region35: #{custom_model_forward.1} parent=31 // pred_region
          %s198 = smul.u32 4, %s22
          %p199 = scmp.lt.s32.totalorder %s21, 1
          %s200 = scalar_select %p199, %s21, 1
          %p201 = scmp.lt.s32.totalorder %s198, 7
          %s202 = scalar_select %p201, %s198, 7
          %s203 = smul.addr %s202, 2
          %s204 = smul.addr %s200, 16
          %s205 = sadd.s32 %s203, %s204
          %s206 = smul.addr %s205, 4
          %s207 = scalar_lea.vmem %s0, %s206
          %s208 = smul.u32 4, %s22
        $region36: #{custom_model_forward.1} parent=31 // pred_fallthru
          _
      $region32: #{custom_model_forward.1} parent=5 // pred_fallthru
        _
      %p209 = scmp.le.s32.totalorder 1, %s14
      %p210 = scmp.lt.s32.totalorder %s14, 5
      %p211 = pnand %p209, %p210
      %p212 = pneg %p211
      // Predicated region
      $region37: #{custom_model_forward.1} parent=5 // pred_check
        _
      $region38: #{custom_model_forward.1} parent=5 // pred_check_branch
        %214 = sbr.rel (%p211) target = $region40
      $region39: #{custom_model_forward.1} parent=5 // pred_region
        %s215 = ssub.s32 %s14, 1
        %s216 = smul.u32 4, %s24
        %p217 = scmp.lt.s32.totalorder %s23, 1
        %s218 = scalar_select %p217, %s23, 1
        %p219 = scmp.lt.s32.totalorder %s216, 7
        %s220 = scalar_select %p219, %s216, 7
        %s221 = smul.addr %s220, 2
        %s222 = smul.addr %s218, 16
        %s223 = sadd.s32 %s221, %s222
        %s224 = smul.addr %s223, 4
        %s225 = scalar_lea.vmem %s0, %s224
        %p226 = pneg %p54
        %p227 = pneg %p51
        %p228 = pneg %p75
        %p229 = pneg %p72
        %p230 = pneg %p96
        %p231 = pneg %p93
        %p232 = pneg %p117
        %p233 = pneg %p114
        %p234 = pneg %p138
        %p235 = pneg %p135
        %p236 = pneg %p164
        %p237 = pneg %p161
        %s238 = sand.u32 %s151, 1
        %s239 = scalar_lea.sflag [#allocation4], %s238
        %s240 = sand.u32 %s151, 1
        %s241 = scalar_lea.vmem [#allocation3], %s240
        %s242 = smul.u32 4, %s24
        %p243 = scmp.lt.s32.totalorder %s23, 1
        %s244 = scalar_select %p243, %s23, 1
        %p245 = scmp.lt.s32.totalorder %s242, 7
        %s246 = scalar_select %p245, %s242, 7
        %s247 = smul.addr %s246, 2
        %s248 = smul.addr %s244, 16
        %s249 = sadd.s32 %s247, %s248
        %s250 = smul.addr %s249, 4
        %s251 = scalar_lea.vmem %s0, %s250
        %s252 = smul.u32 4, %s24
        %p254 = scmp.eq.s32.totalorder %s24, 0
        // Predicated region
        $region41: #{custom_model_forward.1} parent=39 // pred_check
          %p255 = pneg %p254
        $region42: #{custom_model_forward.1} parent=39 // pred_check_branch
          %257 = sbr.rel (%p255) target = $region44
        $region43: #{custom_model_forward.1} parent=39 // pred_region
          %258 = vst [vmem:[#allocation2] sm:$0x1] 0.0
        $region44: #{custom_model_forward.1} parent=39 // pred_fallthru
          _
        %v259 = vld [vmem:[%s251] sm:$0xff]
        %v260 = vld [vmem:[%s251 + $0x8] sm:$0xff]
        %v261 = vld [vmem:[%s251 + $0x10] sm:$0xff]
        %v262 = vld [vmem:[%s251 + $0x18] sm:$0xff]
        %v263 = vld [vmem:[%s1] sm:$0xf]
        %v264 = vld [vmem:[%s1 + $0x4] sm:$0xf]
        %v265 = vld [vmem:[%s1 + $0x8] sm:$0xf]
        %v266 = vld [vmem:[%s1 + $0xc] sm:$0xf]
        %v267 = vld [vmem:[%s1 + $0x10] sm:$0xf]
        %v268 = vld [vmem:[%s1 + $0x14] sm:$0xf]
        %v269 = vld [vmem:[%s1 + $0x18] sm:$0xf]
        %v270 = vld [vmem:[%s1 + $0x1c] sm:$0xf]
        %v271 = vld [vmem:[%s1 + $0x20] sm:$0xf]
        %v272 = vld [vmem:[%s1 + $0x24] sm:$0xf]
        %v273 = vld [vmem:[%s1 + $0x28] sm:$0xf]
        %v274 = vld [vmem:[%s1 + $0x2c] sm:$0xf]
        %v275 = vld [vmem:[%s1 + $0x30] sm:$0xf]
        %v276 = vld [vmem:[%s1 + $0x34] sm:$0xf]
        %v277 = vld [vmem:[%s1 + $0x38] sm:$0xf]
        %v278 = vld [vmem:[%s1 + $0x3c] sm:$0xf]
        %v279 = vld [vmem:[%s1 + $0x40] sm:$0xf]
        %v280 = vld [vmem:[%s1 + $0x44] sm:$0xf]
        %v281 = vld [vmem:[%s1 + $0x48] sm:$0xf]
        %v282 = vld [vmem:[%s1 + $0x4c] sm:$0xf]
        %v283 = vld [vmem:[%s1 + $0x50] sm:$0xf]
        %v284 = vld [vmem:[%s1 + $0x54] sm:$0xf]
        %v285 = vld [vmem:[%s1 + $0x58] sm:$0xf]
        %v286 = vld [vmem:[%s1 + $0x5c] sm:$0xf]
        %v287 = vld [vmem:[%s1 + $0x60] sm:$0xf]
        %v288 = vld [vmem:[%s1 + $0x64] sm:$0xf]
        %v289 = vld [vmem:[%s1 + $0x68] sm:$0xf]
        %v290 = vld [vmem:[%s1 + $0x6c] sm:$0xf]
        %v291 = vld [vmem:[%s1 + $0x70] sm:$0xf]
        %v292 = vld [vmem:[%s1 + $0x74] sm:$0xf]
        %v293 = vld [vmem:[%s1 + $0x78] sm:$0xf]
        %v294 = vld [vmem:[%s1 + $0x7c] sm:$0xf]
        %v295 = vld [vmem:[%s2] sm:$0x1]
        %v297 = vlaneseq
        %v298 = vshrl.u32 %v297, 7
        %v299 = vsub.s32 0, %v298
        %v300 = vrot.slane %v295, %v299
        %v306 = vunpack.c.l.b16 %v259
        %v307 = vunpack.c.h.b16 %v259
        %v308 = vunpack.c.l.b16 %v260
        %v309 = vunpack.c.h.b16 %v260
        %v310 = vunpack.c.l.b16 %v261
        %v311 = vunpack.c.h.b16 %v261
        %v312 = vunpack.c.l.b16 %v262
        %v313 = vunpack.c.h.b16 %v262
        %v314 = vpack.c.b16 %v308, %v306
        %v315 = vpack.c.b16 %v309, %v307
        %v316 = vpack.c.b16 %v312, %v310
        %v317 = vpack.c.b16 %v313, %v311
        %v354 = vunpack.c.l.b16 %v263
        %v355 = vunpack.c.l.b16 %v264
        %v356 = vunpack.c.l.b16 %v265
        %v357 = vunpack.c.l.b16 %v266
        %v358 = vunpack.c.l.b16 %v267
        %v359 = vunpack.c.l.b16 %v268
        %v360 = vunpack.c.l.b16 %v269
        %v361 = vunpack.c.l.b16 %v270
        %v362 = vunpack.c.l.b16 %v271
        %v363 = vunpack.c.l.b16 %v272
        %v364 = vunpack.c.l.b16 %v273
        %v365 = vunpack.c.l.b16 %v274
        %v366 = vunpack.c.l.b16 %v275
        %v367 = vunpack.c.l.b16 %v276
        %v368 = vunpack.c.l.b16 %v277
        %v369 = vunpack.c.l.b16 %v278
        %v370 = vunpack.c.l.b16 %v279
        %v371 = vunpack.c.l.b16 %v280
        %v372 = vunpack.c.l.b16 %v281
        %v373 = vunpack.c.l.b16 %v282
        %v374 = vunpack.c.l.b16 %v283
        %v375 = vunpack.c.l.b16 %v284
        %v376 = vunpack.c.l.b16 %v285
        %v377 = vunpack.c.l.b16 %v286
        %v378 = vunpack.c.l.b16 %v287
        %v379 = vunpack.c.l.b16 %v288
        %v380 = vunpack.c.l.b16 %v289
        %v381 = vunpack.c.l.b16 %v290
        %v382 = vunpack.c.l.b16 %v291
        %v383 = vunpack.c.l.b16 %v292
        %v384 = vunpack.c.l.b16 %v293
        %v385 = vunpack.c.l.b16 %v294
        %v386 = vpack.c.b16 %v355, %v354
        %v387 = vpack.c.b16 %v357, %v356
        %v388 = vpack.c.b16 %v359, %v358
        %v389 = vpack.c.b16 %v361, %v360
        %v390 = vpack.c.b16 %v363, %v362
        %v391 = vpack.c.b16 %v365, %v364
        %v392 = vpack.c.b16 %v367, %v366
        %v393 = vpack.c.b16 %v369, %v368
        %v394 = vpack.c.b16 %v371, %v370
        %v395 = vpack.c.b16 %v373, %v372
        %v396 = vpack.c.b16 %v375, %v374
        %v397 = vpack.c.b16 %v377, %v376
        %v398 = vpack.c.b16 %v379, %v378
        %v399 = vpack.c.b16 %v381, %v380
        %v400 = vpack.c.b16 %v383, %v382
        %v401 = vpack.c.b16 %v385, %v384
        %418 = vmatprep.subr.bf16.mxu0 0
        %419 = vmatpush1.bf16.msra.mxu0 %v386
        %420 = vmatprep.subr.bf16.mxu0 0
        %421 = vmatpush1.bf16.msra.mxu0 %v387
        %422 = vmatprep.subr.bf16.mxu0 0
        %423 = vmatpush1.bf16.msra.mxu0 %v388
        %424 = vmatprep.subr.bf16.mxu0 0
        %425 = vmatpush1.bf16.msra.mxu0 %v389
        %426 = vmatprep.subr.bf16.mxu0 0
        %427 = vmatpush1.bf16.msra.mxu0 %v390
        %428 = vmatprep.subr.bf16.mxu0 0
        %429 = vmatpush1.bf16.msra.mxu0 %v391
        %430 = vmatprep.subr.bf16.mxu0 0
        %431 = vmatpush1.bf16.msra.mxu0 %v392
        %432 = vmatprep.subr.bf16.mxu0 0
        %433 = vmatpush1.bf16.msra.mxu0 %v393
        %434 = vmatprep.subr.bf16.mxu0 0
        %435 = vmatpush1.bf16.msra.mxu0 %v394
        %436 = vmatprep.subr.bf16.mxu0 0
        %437 = vmatpush1.bf16.msra.mxu0 %v395
        %438 = vmatprep.subr.bf16.mxu0 0
        %439 = vmatpush1.bf16.msra.mxu0 %v396
        %440 = vmatprep.subr.bf16.mxu0 0
        %441 = vmatpush1.bf16.msra.mxu0 %v397
        %442 = vmatprep.subr.bf16.mxu0 0
        %443 = vmatpush1.bf16.msra.mxu0 %v398
        %444 = vmatprep.subr.bf16.mxu0 0
        %445 = vmatpush1.bf16.msra.mxu0 %v399
        %446 = vmatprep.subr.bf16.mxu0 0
        %447 = vmatpush1.bf16.msra.mxu0 %v400
        %448 = vmatprep.subr.bf16.mxu0 0
        %449 = vmatpush1.bf16.msra.mxu0 %v401
        %450 = vmatprep.mubr.bf16.mxu0 %v315
        %451 = vmatmul.mubr.bf16.gmra.mrb[0].mxu0 %v314
        %v452 = vpop.f32.mrb[0].mxu0
        %v453 = vadd.f32 %v300, %v452
        %v454 = vpop.f32.mrb[0].mxu0
        %v455 = vpop.f32.mrb[0].mxu0
        %v456 = vadd.f32 %v300, %v455
        %v457 = vpop.f32.mrb[0].mxu0
        %458 = vmatprep.mubr.bf16.mxu0 %v317
        %459 = vmatmul.mubr.bf16.gmra.mrb[0].mxu0 %v316
        %v460 = vpop.f32.mrb[0].mxu0
        %v461 = vadd.f32 %v300, %v460
        %v462 = vpop.f32.mrb[0].mxu0
        %v463 = vpop.f32.mrb[0].mxu0
        %v464 = vadd.f32 %v300, %v463
        %v465 = vpop.f32.mrb[0].mxu0
        %466 = vdwg.mxu0
        %v467 = vmax.f32 %v453, 0.0
        %v468 = vmax.f32 %v456, 0.0
        %v469 = vmax.f32 %v461, 0.0
        %v470 = vmax.f32 %v464, 0.0
        %v471 = vld [vmem:[#allocation2] sm:$0x1]
        %v472 = vadd.f32 %v467, %v468
        %v473 = vadd.f32 %v472, %v469
        %v474 = vadd.f32 %v473, %v470
        %v475 = vrot.slane %v474, 4
        %v476 = vadd.f32 %v474, %v475
        %v477 = vrot.slane %v476, 2
        %v478 = vadd.f32 %v476, %v477
        %v479 = vrot.slane %v478, 1
        %v480 = vadd.f32 %v478, %v479
        %v481 = vadd.f32 %v471, %v480
        %482 = vst [vmem:[#allocation2] sm:$0x1] %v481
        %p483 = scmp.eq.s32.totalorder %s24, 1
        // Predicated region
        $region45: #{custom_model_forward.1} parent=39 // pred_check
          %p484 = pneg %p483
        $region46: #{custom_model_forward.1} parent=39 // pred_check_branch
          %486 = sbr.rel (%p484) target = $region48
        $region47: #{custom_model_forward.1} parent=39 // pred_region
          %v487 = vld [vmem:[#allocation2] sm:$0x1]
          %v488 = vmul.f32 %v487, 0.015625
          %v489 = vld [vmem:[%s3] sm:$0xff]
          %v490 = vld [vmem:[%s3 + $0x8] sm:$0xff]
          %v491 = vld [vmem:[%s3 + $0x10] sm:$0xff]
          %v492 = vld [vmem:[%s3 + $0x18] sm:$0xff]
          %v493 = vld [vmem:[%s3 + $0x20] sm:$0xff]
          %v494 = vld [vmem:[%s3 + $0x28] sm:$0xff]
          %v495 = vld [vmem:[%s3 + $0x30] sm:$0xff]
          %v496 = vld [vmem:[%s3 + $0x38] sm:$0xff]
          %v497 = vld [vmem:[%s3 + $0x40] sm:$0xff]
          %v498 = vld [vmem:[%s3 + $0x48] sm:$0xff]
          %v499 = vld [vmem:[%s3 + $0x50] sm:$0xff]
          %v500 = vld [vmem:[%s3 + $0x58] sm:$0xff]
          %v501 = vld [vmem:[%s3 + $0x60] sm:$0xff]
          %v502 = vld [vmem:[%s3 + $0x68] sm:$0xff]
          %v503 = vld [vmem:[%s3 + $0x70] sm:$0xff]
          %v504 = vld [vmem:[%s3 + $0x78] sm:$0xff]
          %v505 = vld [vmem:[%s4] sm:$0x1]
          %506 = vmatprep.subr.mxu0 0.0
          %507 = vmatpush1.msra.mxu0 %v489
          %508 = vmatprep.subr.mxu0 0.0
          %509 = vmatpush1.msra.mxu0 %v490
          %510 = vmatprep.subr.mxu0 0.0
          %511 = vmatpush1.msra.mxu0 %v491
          %512 = vmatprep.subr.mxu0 0.0
          %513 = vmatpush1.msra.mxu0 %v492
          %514 = vmatprep.subr.mxu0 0.0
          %515 = vmatpush1.msra.mxu0 %v493
          %516 = vmatprep.subr.mxu0 0.0
          %517 = vmatpush1.msra.mxu0 %v494
          %518 = vmatprep.subr.mxu0 0.0
          %519 = vmatpush1.msra.mxu0 %v495
          %520 = vmatprep.subr.mxu0 0.0
          %521 = vmatpush1.msra.mxu0 %v496
          %522 = vmatprep.subr.mxu0 0.0
          %523 = vmatpush1.msra.mxu0 %v497
          %524 = vmatprep.subr.mxu0 0.0
          %525 = vmatpush1.msra.mxu0 %v498
          %526 = vmatprep.subr.mxu0 0.0
          %527 = vmatpush1.msra.mxu0 %v499
          %528 = vmatprep.subr.mxu0 0.0
          %529 = vmatpush1.msra.mxu0 %v500
          %530 = vmatprep.subr.mxu0 0.0
          %531 = vmatpush1.msra.mxu0 %v501
          %532 = vmatprep.subr.mxu0 0.0
          %533 = vmatpush1.msra.mxu0 %v502
          %534 = vmatprep.subr.mxu0 0.0
          %535 = vmatpush1.msra.mxu0 %v503
          %536 = vmatprep.subr.mxu0 0.0
          %537 = vmatpush1.msra.mxu0 %v504
          %538 = vmatprep.subr.mxu0 0.0
          %539 = vmatpush1.msra.mxu0 0.0
          %540 = vmatprep.subr.mxu0 0.0
          %541 = vmatpush1.msra.mxu0 0.0
          %542 = vmatprep.subr.mxu0 0.0
          %543 = vmatpush1.msra.mxu0 0.0
          %544 = vmatprep.subr.mxu0 0.0
          %545 = vmatpush1.msra.mxu0 0.0
          %546 = vmatprep.subr.mxu0 0.0
          %547 = vmatpush1.msra.mxu0 0.0
          %548 = vmatprep.subr.mxu0 0.0
          %549 = vmatpush1.msra.mxu0 0.0
          %550 = vmatprep.subr.mxu0 0.0
          %551 = vmatpush1.msra.mxu0 0.0
          %552 = vmatprep.subr.mxu0 0.0
          %553 = vmatpush1.msra.mxu0 0.0
          %554 = vmatprep.subr.mxu0 0.0
          %555 = vmatpush1.msra.mxu0 0.0
          %556 = vmatprep.subr.mxu0 0.0
          %557 = vmatpush1.msra.mxu0 0.0
          %558 = vmatprep.subr.mxu0 0.0
          %559 = vmatpush1.msra.mxu0 0.0
          %560 = vmatprep.subr.mxu0 0.0
          %561 = vmatpush1.msra.mxu0 0.0
          %562 = vmatprep.subr.mxu0 0.0
          %563 = vmatpush1.msra.mxu0 0.0
          %564 = vmatprep.subr.mxu0 0.0
          %565 = vmatpush1.msra.mxu0 0.0
          %566 = vmatprep.subr.mxu0 0.0
          %567 = vmatpush1.msra.mxu0 0.0
          %568 = vmatprep.subr.mxu0 0.0
          %569 = vmatpush1.msra.mxu0 0.0
          %570 = vmatprep.mubr.f32.mxu0 0.0
          %571 = vmatmul.mubr.f32.gmra.mrb[0].mxu0 %v488
          %v572 = vpop.f32.mrb[0].mxu0
          %v573 = vadd.f32 %v505, %v572
          %v574 = vpop.f32.mrb[0].mxu0
          %575 = vdwg.mxu0
          %576 = vst [vmem:[%s241] sm:$0x1] %v573
        $region48: #{custom_model_forward.1} parent=39 // pred_fallthru
          _
        %s577 = sand.u32 %s151, 1
        %s578 = scalar_lea.sflag [#allocation4], %s577
        %s579 = sand.u32 %s151, 1
        %s580 = scalar_lea.vmem [#allocation3], %s579
        // Predicated region
        $region49: #{custom_model_forward.1} parent=39 // pred_check
          %p581 = pneg %p161
        $region50: #{custom_model_forward.1} parent=39 // pred_check_branch
          %583 = sbr.rel (%p581) target = $region52
        $region51: #{custom_model_forward.1} parent=39 // pred_region
          %s585 = ssub.s32 16, 16
          %586 = vsyncadd %s578, %s585
          %s587 = smul.addr %s23, 16
          %s588 = scalar_lea.hbm %s5, %s587
          %s590 = sshll.u32 %s580, 4
          %s591 = int_to_ptr.vmem [resolvable:$true] %s590
          %593 = dma.vmem_to_hbm [thread:$0]  %s591, 16, %s588, %s578
        $region52: #{custom_model_forward.1} parent=39 // pred_fallthru
          _
      $region40: #{custom_model_forward.1} parent=5 // pred_fallthru
        _
      %p594 = scmp.le.s32.totalorder 2, %s14
      // Predicated region
      $region53: #{custom_model_forward.1} parent=5 // pred_check
        %p595 = pneg %p594
      $region54: #{custom_model_forward.1} parent=5 // pred_check_branch
        %597 = sbr.rel (%p595) target = $region56
      $region55: #{custom_model_forward.1} parent=5 // pred_region
        %s598 = ssub.s32 %s14, 2
        // Predicated region
        $region57: #{custom_model_forward.1} parent=55 // pred_check
          %p599 = pneg %p167
        $region58: #{custom_model_forward.1} parent=55 // pred_check_branch
          %601 = sbr.rel (%p599) target = $region60
        $region59: #{custom_model_forward.1} parent=55 // pred_region
          %s602 = sand.u32 %s152, 1
          %s603 = scalar_lea.sflag [#allocation4], %s602
          %s604 = sand.u32 %s152, 1
          %s605 = scalar_lea.vmem [#allocation3], %s604
          %606 = dma.done %s603, 16
        $region60: #{custom_model_forward.1} parent=55 // pred_fallthru
          _
      $region56: #{custom_model_forward.1} parent=5 // pred_fallthru
        _
    $region6: #{custom_model_forward.1} parent=1 // loop_footer
      %s18 = sadd.s32 1, %s14
    $region7: #{custom_model_forward.1} parent=1 // loop_footer_branch
      %13 = sbr.rel target = $region3
    $region8: #{custom_model_forward.1} parent=1 // loop_exit
      _
    %607 = vsyncpa [#allocation4], 1
    %s608 = scalar_lea.sflag [#allocation4], 1
    %609 = vsyncpa %s608, 1

</llo_original>
